<compile_context>
chip_gen: v7x
topology: tpu7x:2x2x1
jax: 0.10.0
libtpu: 0.0.40
codegen_flags: <defaults>
</compile_context>

<pallas_src>
import functools

import jax
import jax.numpy as jnp
from jax import lax
from jax.experimental import pallas as pl
from jax.experimental.pallas import tpu as pltpu

_VMEM_LIMIT = 32 * 1024 * 1024    # safe scoped-VMEM cap on v5e / v6e / v7x
_VMEM_BUDGET = 8 * 1024 * 1024    # per-step working-set budget used to pick BK


def _pick_bk(b, bytes_per_batch):
    """Batch elements per grid step.

    Whole batch when it fits (amortizes per-step grid overhead); otherwise the
    largest divisor of B that is a multiple of 8 (keeps (BK, .) 2-D blocks legal
    under the (8, 128) rule) and fits the budget with double buffering.
    """
    if 2 * b * bytes_per_batch <= _VMEM_BUDGET:
        return b
    for d in range(b, 0, -1):
        if b % d == 0 and d % 8 == 0 and 2 * d * bytes_per_batch <= _VMEM_BUDGET:
            return d
    return b


# ----------------------------- Pallas kernels ------------------------------ #

def _stats_kernel(x_ref, cov_ref, mean_ref, var_ref):
    """Centered covariance, mean, unbiased variance for BK batch elements."""
    x = x_ref[...].astype(jnp.float32)                       # (BK, C, T)
    t = x.shape[2]
    inv = 1.0 / (t - 1)
    mean = jnp.mean(x, axis=2, keepdims=True)                # (BK, C, 1)
    xm = x - mean
    # Batched (BK, C, T) x (BK, C, T)^T -> (BK, C, C) on the MXU.
    cov = lax.dot_general(xm, xm, (((2,), (2,)), ((0,), (0,))),
                          preferred_element_type=jnp.float32) * inv
    cov_ref[...] = cov
    mean_ref[...] = mean
    var_ref[...] = jnp.sum(xm * xm, axis=2, keepdims=True) * inv


def _fused_kernel(feats_ref, x_ref, mean_ref, var_ref,
                  w1t_ref, b1_ref, w2t_ref, b2_ref,
                  o_ref, w_sc, b_sc, *, n_out, soft_thresh):
    """MLP -> soft-threshold -> z-score(x) -> per-batch spatial filter apply."""
    bk, c, t = x_ref.shape

    # z-score over time (unbiased std, matching torch.std); mean/var come from
    # the stats kernel, so the (C, T) tile is not re-reduced here.
    x = x_ref[...].astype(jnp.float32)
    xn = (x - mean_ref[...]) * lax.rsqrt(var_ref[...])       # (BK, C, T)

    # Linear -> ReLU -> Linear (weights pre-transposed to (in, out)).
    h = jnp.dot(feats_ref[...], w1t_ref[...],
                preferred_element_type=jnp.float32) + b1_ref[...]
    h = jnp.maximum(h, 0.0)
    fo = jnp.dot(h, w2t_ref[...],
                 preferred_element_type=jnp.float32) + b2_ref[...]  # (BK, n_out*C + n_out)

    # Repack the flat MLP output into (BK, n_out, C) filter weights and
    # (BK, n_out, 1) biases via small VMEM scratch (static lane slices + ref
    # stores only -- avoids in-register lane->sublane reshapes).
    st = float(soft_thresh)
    for o in range(n_out):                                    # static unroll
        w_o = fo[:, o * c:(o + 1) * c]                        # (BK, C)
        if st > 0:
            w_o = jnp.maximum(w_o - st, 0.0) + jnp.minimum(w_o + st, 0.0)
        w_sc[:, o, :] = w_o
        b_sc[:, o, :] = fo[:, n_out * c + o:n_out * c + o + 1]

    y = jnp.einsum("boc,bct->bot", w_sc[...], xn,
                   preferred_element_type=jnp.float32)        # (BK, n_out, T)
    o_ref[...] = y + b_sc[...]


# ------------------------------ Pallas wrappers ----------------------------- #

def _batched_stats(x):
    b_, c, t = x.shape
    bk = _pick_bk(b_, bytes_per_batch=(c * t + c * c + 2 * c) * 4)
    return pl.pallas_call(
        _stats_kernel,
        out_shape=(jax.ShapeDtypeStruct((b_, c, c), jnp.float32),
                   jax.ShapeDtypeStruct((b_, c, 1), jnp.float32),
                   jax.ShapeDtypeStruct((b_, c, 1), jnp.float32)),
        grid=(b_ // bk,),
        in_specs=[pl.BlockSpec((bk, c, t), lambda i: (i, 0, 0))],
        out_specs=(pl.BlockSpec((bk, c, c), lambda i: (i, 0, 0)),
                   pl.BlockSpec((bk, c, 1), lambda i: (i, 0, 0)),
                   pl.BlockSpec((bk, c, 1), lambda i: (i, 0, 0))),
        compiler_params=pltpu.CompilerParams(
            dimension_semantics=("parallel",),
            vmem_limit_bytes=_VMEM_LIMIT),
    )(x)


def _fused_mlp_apply(feats, x, mean, var, kparams, n_out, soft_thresh):
    b_, c, t = x.shape
    f = feats.shape[1]
    w1t, b1 = kparams["w1t"], kparams["b1"]
    w2t, b2 = kparams["w2t"], kparams["b2"]
    hid, out = w2t.shape

    bk = _pick_bk(b_, bytes_per_batch=(f + c * t + 2 * c + n_out * t) * 4)
    kern = functools.partial(_fused_kernel, n_out=n_out,
                             soft_thresh=float(soft_thresh))
    return pl.pallas_call(
        kern,
        out_shape=jax.ShapeDtypeStruct((b_, n_out, t), jnp.float32),
        grid=(b_ // bk,),
        in_specs=[
            pl.BlockSpec((bk, f), lambda i: (i, 0)),            # feats
            pl.BlockSpec((bk, c, t), lambda i: (i, 0, 0)),      # x
            pl.BlockSpec((bk, c, 1), lambda i: (i, 0, 0)),      # mean
            pl.BlockSpec((bk, c, 1), lambda i: (i, 0, 0)),      # var
            pl.BlockSpec((f, hid), lambda i: (0, 0)),           # w1^T (shared)
            pl.BlockSpec((1, hid), lambda i: (0, 0)),           # b1
            pl.BlockSpec((hid, out), lambda i: (0, 0)),         # w2^T (shared)
            pl.BlockSpec((1, out), lambda i: (0, 0)),           # b2
        ],
        out_specs=pl.BlockSpec((bk, n_out, t), lambda i: (i, 0, 0)),
        scratch_shapes=[pltpu.VMEM((bk, n_out, c), jnp.float32),
                        pltpu.VMEM((bk, n_out, 1), jnp.float32)],
        compiler_params=pltpu.CompilerParams(
            dimension_semantics=("parallel",),
            vmem_limit_bytes=_VMEM_LIMIT),
    )(feats, x, mean, var, w1t, b1, w2t, b2)


# ------------------------------- Module glue -------------------------------- #

def init_params(key, n_in_channels, n_out_channels, logcov=True):
    """Raw parameters, laid out exactly like the torch module's nn.Linear s."""
    inp = n_in_channels * (n_in_channels + 1) // 2 if logcov else n_in_channels
    out = n_out_channels * n_in_channels + n_out_channels
    hid = out // 8
    k1, k2, k3, k4 = jax.random.split(key, 4)
    return {
        "w1": 0.1 * jax.random.normal(k1, (hid, inp), jnp.float32),
        "b1": 0.1 * jax.random.normal(k2, (hid,), jnp.float32),
        "w2": 0.1 * jax.random.normal(k3, (out, hid), jnp.float32),
        "b2": 0.1 * jax.random.normal(k4, (out,), jnp.float32),
    }


def prepare_params(params, n_in_channels, logcov=True):
    """One-time kernel-side weight prep: transpose to (in, out) and fold the
    upper-triangle selection into w1 (zero rows for the lower triangle), so the
    kernel consumes the flat C*C log-cov with no strided triu gather."""
    w1, b1, w2, b2 = params["w1"], params["b1"], params["w2"], params["b2"]
    if logcov:
        c = n_in_channels
        iu = jnp.triu_indices(c)
        flat = iu[0] * c + iu[1]
        w1t = jnp.zeros((c * c, w1.shape[0]), w1.dtype).at[flat].set(w1.T)
    else:
        w1t = w1.T
    return {"w1t": w1t, "b1": b1.reshape(1, -1),
            "w2t": w2.T, "b2": b2.reshape(1, -1)}


def dynamic_spatial_block(x, kparams, n_in_channels, n_out_channels,
                          logcov=True, soft_thresh=0.1):
    b_, c, t = x.shape
    assert c == n_in_channels

    cov, mean, var = _batched_stats(x)

    if logcov:
        # TODO(synk): torch.linalg.eigh has no Pallas equivalent; the batched
        # CxC eigendecomposition (and its log recompose) stays in plain JAX.
        e, v = jnp.linalg.eigh(cov)
        le = jnp.log(jnp.maximum(e, 1e-10))
        log_cov = jnp.einsum("bij,bj,bkj->bik", v, le, v)
        feats = log_cov.reshape(b_, c * c)      # triu selection folded into w1t
        st = soft_thresh
    else:
        feats = jnp.log(var[:, :, 0])
        feats = jnp.where(jnp.isneginf(feats), 0.0, feats)
        st = 0.0

    return _fused_mlp_apply(feats, x, mean, var, kparams, n_out_channels, st)


# ------------------------------ Pure-JAX reference -------------------------- #

def _reference(x, params, n_in, n_out, soft_thresh=0.1):
    b_, c, t = x.shape
    xm = x - x.mean(axis=2, keepdims=True)
    cov = jnp.einsum("bct,bdt->bcd", xm, xm) / (t - 1)
    e, v = jnp.linalg.eigh(cov)
    e = jnp.log(jnp.maximum(e, 1e-10))
    log_cov = jnp.einsum("bij,bj,bkj->bik", v, e, v)
    iu = jnp.triu_indices(c)
    feats = log_cov[:, iu[0], iu[1]]
    h = jnp.maximum(feats @ params["w1"].T + params["b1"], 0.0)
    feats = h @ params["w2"].T + params["b2"]
    w = feats[:, :-n_out].reshape(b_, n_out, n_in)
    bb = feats[:, -n_out:].reshape(b_, n_out, 1)
    w = jnp.maximum(w - soft_thresh, 0.0) + jnp.minimum(w + soft_thresh, 0.0)
    xn = xm / jnp.sqrt(jnp.var(x, axis=2, ddof=1, keepdims=True))
    return jnp.einsum("boc,bct->bot", w, xn) + bb


# ----------------------------------- Main ----------------------------------- #

if __name__ == "__main__":
    B, C_IN, C_OUT, T = 2, 8, 4, 16

    key = jax.random.PRNGKey(0)
    kx, kp = jax.random.split(key)
    x = jax.random.normal(kx, (B, C_IN, T), jnp.float32)

    params = init_params(kp, C_IN, C_OUT, logcov=True)
    kparams = prepare_params(params, C_IN, logcov=True)   # one-time weight prep

    out = dynamic_spatial_block(x, kparams, C_IN, C_OUT,
                                logcov=True, soft_thresh=0.1)
    out = jax.block_until_ready(out)
    assert out.shape == (B, C_OUT, T), out.shape

    ref = jax.block_until_ready(_reference(x, params, C_IN, C_OUT, soft_thresh=0.1))
    assert jnp.allclose(out, ref, atol=1e-3, rtol=1e-3), "mismatch vs reference"

    print("KERNEL_OK")
</pallas_src>

<mosaic_0001>
module attributes {stable_mosaic.version = 11 : i64} {
  func.func @_stats_kernel(%arg0: i32, %arg1: memref<2x8x16xf32, #tpu.memory_space<vmem>>, %arg2: memref<2x8x8xf32, #tpu.memory_space<vmem>>, %arg3: memref<2x8x1xf32, #tpu.memory_space<vmem>>, %arg4: memref<2x8x1xf32, #tpu.memory_space<vmem>>) attributes {dimension_semantics = [#tpu.dimension_semantics<parallel>], iteration_bounds = array<i64: 1>, scalar_prefetch = 0 : i64, scratch_operands = 0 : i64, tpu.core_type = #tpu.core_type<tc>, window_params = [{transform_indices = @transform_0, window_bounds = array<i64: 2, 8, 16>}, {transform_indices = @transform_1, window_bounds = array<i64: 2, 8, 8>}, {transform_indices = @transform_2, window_bounds = array<i64: 2, 8, 1>}, {transform_indices = @transform_3, window_bounds = array<i64: 2, 8, 1>}]} {
    %c0 = arith.constant 0 : index
    %c0_0 = arith.constant 0 : index
    %c0_1 = arith.constant 0 : index
    %0 = vector.load %arg1[%c0, %c0_0, %c0_1] : memref<2x8x16xf32, #tpu.memory_space<vmem>>, vector<2x8x16xf32>
    %cst = arith.constant dense<0.000000e+00> : vector<2x8xf32>
    %1 = vector.multi_reduction <add>, %0, %cst [2] : vector<2x8x16xf32> to vector<2x8xf32>
    %2 = vector.shape_cast %1 : vector<2x8xf32> to vector<2x8x1xf32>
    %cst_2 = arith.constant 1.600000e+01 : f32
    %3 = vector.broadcast %cst_2 : f32 to vector<2x8x1xf32>
    %4 = arith.divf %2, %3 : vector<2x8x1xf32>
    %5 = vector.broadcast %4 : vector<2x8x1xf32> to vector<2x8x16xf32>
    %6 = arith.subf %0, %5 : vector<2x8x16xf32>
    %cst_3 = arith.constant dense<0.000000e+00> : vector<2x8x8xf32>
    %7 = tpu.matmul %6, %6, %cst_3 {dimension_numbers = #tpu.dot_dimension_numbers<[2], [2], [1], [1], [0, 0, 0, 1, 1, 1], [0], [0]>} : vector<2x8x16xf32>, vector<2x8x16xf32>, vector<2x8x8xf32> -> vector<2x8x8xf32>
    %cst_4 = arith.constant 0.0666666701 : f32
    %8 = vector.broadcast %cst_4 : f32 to vector<2x8x8xf32>
    %9 = arith.mulf %7, %8 : vector<2x8x8xf32>
    %c0_5 = arith.constant 0 : index
    %c0_6 = arith.constant 0 : index
    %c0_7 = arith.constant 0 : index
    %10 = vector.load %arg2[%c0_5, %c0_6, %c0_7] : memref<2x8x8xf32, #tpu.memory_space<vmem>>, vector<2x8x8xf32>
    tpu.vector_store %arg2[%c0_5, %c0_6, %c0_7], %9 {strides = array<i32>} : memref<2x8x8xf32, #tpu.memory_space<vmem>>, vector<2x8x8xf32>,
    %c0_8 = arith.constant 0 : index
    %c0_9 = arith.constant 0 : index
    %c0_10 = arith.constant 0 : index
    %11 = vector.load %arg3[%c0_8, %c0_9, %c0_10] : memref<2x8x1xf32, #tpu.memory_space<vmem>>, vector<2x8x1xf32>
    tpu.vector_store %arg3[%c0_8, %c0_9, %c0_10], %4 {strides = array<i32>} : memref<2x8x1xf32, #tpu.memory_space<vmem>>, vector<2x8x1xf32>,
    %12 = arith.mulf %6, %6 : vector<2x8x16xf32>
    %cst_11 = arith.constant dense<0.000000e+00> : vector<2x8xf32>
    %13 = vector.multi_reduction <add>, %12, %cst_11 [2] : vector<2x8x16xf32> to vector<2x8xf32>
    %14 = vector.shape_cast %13 : vector<2x8xf32> to vector<2x8x1xf32>
    %cst_12 = arith.constant 0.0666666701 : f32
    %15 = vector.broadcast %cst_12 : f32 to vector<2x8x1xf32>
    %16 = arith.mulf %14, %15 : vector<2x8x1xf32>
    %c0_13 = arith.constant 0 : index
    %c0_14 = arith.constant 0 : index
    %c0_15 = arith.constant 0 : index
    %17 = vector.load %arg4[%c0_13, %c0_14, %c0_15] : memref<2x8x1xf32, #tpu.memory_space<vmem>>, vector<2x8x1xf32>
    tpu.vector_store %arg4[%c0_13, %c0_14, %c0_15], %16 {strides = array<i32>} : memref<2x8x1xf32, #tpu.memory_space<vmem>>, vector<2x8x1xf32>,
    return
  }
  func.func @transform_0(%arg0: i32) -> (i32, i32, i32) {
    %c0_i32 = arith.constant 0 : i32
    %c0_i32_0 = arith.constant 0 : i32
    %c0_i32_1 = arith.constant 0 : i32
    return %arg0, %c0_i32, %c0_i32_0 : i32, i32, i32
  }
  func.func @transform_1(%arg0: i32) -> (i32, i32, i32) {
    %c0_i32 = arith.constant 0 : i32
    %c0_i32_0 = arith.constant 0 : i32
    %c0_i32_1 = arith.constant 0 : i32
    return %arg0, %c0_i32, %c0_i32_0 : i32, i32, i32
  }
  func.func @transform_2(%arg0: i32) -> (i32, i32, i32) {
    %c0_i32 = arith.constant 0 : i32
    %c0_i32_0 = arith.constant 0 : i32
    %c0_i32_1 = arith.constant 0 : i32
    return %arg0, %c0_i32, %c0_i32_0 : i32, i32, i32
  }
  func.func @transform_3(%arg0: i32) -> (i32, i32, i32) {
    %c0_i32 = arith.constant 0 : i32
    %c0_i32_0 = arith.constant 0 : i32
    %c0_i32_1 = arith.constant 0 : i32
    return %arg0, %c0_i32, %c0_i32_0 : i32, i32, i32
  }
}

</mosaic_0001>

<llo_original>
// kernel: tpu_custom_call.1
$region0: #{tpu_custom_call.1}
  #allocation0 [shape = 'u32[]', space=smem, size = 0x4, offset = 0x4, fixed_abs, tag = 'smem constant byte address 0x4 - core index']
  #allocation1 [shape = 'u32[144,128]{1,0:T(1,128)}', space=vmem, size = 0x12000, scoped, tag = 'internal scratch']
  %s0 = inlined_call_operand.hbm [shape: f32[2,8,16], index: 0, kind: input, shape index: {}]
  %s1 = inlined_call_operand.hbm [shape: f32[2,8,8], index: 1, kind: output, shape index: {0}]
  %s2 = inlined_call_operand.vmem [shape: f32[2,8,1], index: 2, kind: output, shape index: {1}]
  %s3 = inlined_call_operand.vmem [shape: f32[2,8,1], index: 3, kind: output, shape index: {2}]
  %4 = xla_tuple %s1, %s2, %s3
  %s5 = sld [smem:[#allocation0]]
  $region34: #{tpu_custom_call.1} parent=0
    _
  %s7 = ssub.s32 1, %s5
  %s8 = scalar_select 0, %s7, %s5
  $region1: #{tpu_custom_call.1} parent=0
    #allocation2 [shape = 'u8[8192]{0}', space=vmem, size = 0x2000, scoped, tag = 'input window, operand 0, single buffered']
    #allocation3 [shape = 's32[1]{0}', space=sflag, size = 0x4, scoped, tag = 'scoped memory for tpu_custom_call.1']
    #allocation4 [shape = 's32[1]{0}', space=sflag, size = 0x4, scoped, tag = 'scoped memory for tpu_custom_call.1']
    #allocation5 [shape = 'u8[8192]{0}', space=vmem, size = 0x2000, scoped, tag = 'output window, operand 0, single buffered']
    %9 = vsyncpa [#allocation3], 0
    %10 = vsyncpa [#allocation4], 0
    // Predicated region
    $region2: #{tpu_custom_call.1} parent=1 // pred_check
      _
    $region3: #{tpu_custom_call.1} parent=1 // pred_check_branch
      %12 = sbr.rel (0) target = $region5
    $region4: #{tpu_custom_call.1} parent=1 // pred_region
      %s14 = ssub.s32 256, 256
      %15 = vsyncadd [#allocation3], %s14
      %s16 = sshll.u32 [#allocation2], 4
      %s17 = int_to_ptr.vmem [resolvable:$true] %s16
      %22 = dma.hbm_to_vmem [thread:$0]  %s0, 256, %s17, [#allocation3], 128, 128, 8
    $region5: #{tpu_custom_call.1} parent=1 // pred_fallthru
      _
    // Predicated region
    $region6: #{tpu_custom_call.1} parent=1 // pred_check
      _
    $region7: #{tpu_custom_call.1} parent=1 // pred_check_branch
      %24 = sbr.rel (0) target = $region9
    $region8: #{tpu_custom_call.1} parent=1 // pred_region
      %25 = dma.done [#allocation3], 256
    $region9: #{tpu_custom_call.1} parent=1 // pred_fallthru
      _
    %v26 = vld [vmem:[#allocation2] sm:$0xff]
    %v27 = vld [vmem:[#allocation2 + $0x8] sm:$0xff]
    %vm28 = vcmask 130048
    %v29 = vsel %vm28, %v26, 0.0
    %30 = vadd.xlane.f32.xlu0 %v29
    %v31 = vpop.xlane.xlu0 %30
    %v32 = vsel %vm28, %v27, 0.0
    %33 = vadd.xlane.f32.xlu0 %v32
    %v34 = vpop.xlane.xlu0 %33
    %v35 = vrcp.pop 16.0
    %v36 = vmul.f32 %v31, %v35
    %v37 = vmul.f32 %v34, %v35
    %v38 = vsub.f32 %v26, %v36
    %v39 = vsub.f32 %v27, %v37
    %v41 = vsel %vm28, %v38, 0
    %43 = vmatprep.subr.mxu0 0.0
    %44 = vmatpush1.xpose.msra.mxu0 %v41
    %45 = vmatprep.subr.mxu0 0.0
    %46 = vmatpush1.xpose.msra.mxu0 0.0
    %47 = vmatprep.subr.mxu0 0.0
    %48 = vmatpush1.xpose.msra.mxu0 0.0
    %49 = vmatprep.subr.mxu0 0.0
    %50 = vmatpush1.xpose.msra.mxu0 0.0
    %51 = vmatprep.subr.mxu0 0.0
    %52 = vmatpush1.xpose.msra.mxu0 0.0
    %53 = vmatprep.subr.mxu0 0.0
    %54 = vmatpush1.xpose.msra.mxu0 0.0
    %55 = vmatprep.subr.mxu0 0.0
    %56 = vmatpush1.xpose.msra.mxu0 0.0
    %57 = vmatprep.subr.mxu0 0.0
    %58 = vmatpush1.xpose.msra.mxu0 0.0
    %59 = vmatprep.subr.mxu0 0.0
    %60 = vmatpush1.xpose.msra.mxu0 0.0
    %61 = vmatprep.subr.mxu0 0.0
    %62 = vmatpush1.xpose.msra.mxu0 0.0
    %63 = vmatprep.subr.mxu0 0.0
    %64 = vmatpush1.xpose.msra.mxu0 0.0
    %65 = vmatprep.subr.mxu0 0.0
    %66 = vmatpush1.xpose.msra.mxu0 0.0
    %67 = vmatprep.subr.mxu0 0.0
    %68 = vmatpush1.xpose.msra.mxu0 0.0
    %69 = vmatprep.subr.mxu0 0.0
    %70 = vmatpush1.xpose.msra.mxu0 0.0
    %71 = vmatprep.subr.mxu0 0.0
    %72 = vmatpush1.xpose.msra.mxu0 0.0
    %73 = vmatprep.subr.mxu0 0.0
    %74 = vmatpush1.xpose.msra.mxu0 0.0
    %75 = vmatprep.subr.mxu0 0.0
    %76 = vmatpush1.xpose.msra.mxu0 0.0
    %77 = vmatprep.subr.mxu0 0.0
    %78 = vmatpush1.xpose.msra.mxu0 0.0
    %79 = vmatprep.subr.mxu0 0.0
    %80 = vmatpush1.xpose.msra.mxu0 0.0
    %81 = vmatprep.subr.mxu0 0.0
    %82 = vmatpush1.xpose.msra.mxu0 0.0
    %83 = vmatprep.subr.mxu0 0.0
    %84 = vmatpush1.xpose.msra.mxu0 0.0
    %85 = vmatprep.subr.mxu0 0.0
    %86 = vmatpush1.xpose.msra.mxu0 0.0
    %87 = vmatprep.subr.mxu0 0.0
    %88 = vmatpush1.xpose.msra.mxu0 0.0
    %89 = vmatprep.subr.mxu0 0.0
    %90 = vmatpush1.xpose.msra.mxu0 0.0
    %91 = vmatprep.subr.mxu0 0.0
    %92 = vmatpush1.xpose.msra.mxu0 0.0
    %93 = vmatprep.subr.mxu0 0.0
    %94 = vmatpush1.xpose.msra.mxu0 0.0
    %95 = vmatprep.subr.mxu0 0.0
    %96 = vmatpush1.xpose.msra.mxu0 0.0
    %97 = vmatprep.subr.mxu0 0.0
    %98 = vmatpush1.xpose.msra.mxu0 0.0
    %99 = vmatprep.subr.mxu0 0.0
    %100 = vmatpush1.xpose.msra.mxu0 0.0
    %101 = vmatprep.subr.mxu0 0.0
    %102 = vmatpush1.xpose.msra.mxu0 0.0
    %103 = vmatprep.subr.mxu0 0.0
    %104 = vmatpush1.xpose.msra.mxu0 0.0
    %105 = vmatprep.subr.mxu0 0.0
    %106 = vmatpush1.xpose.msra.mxu0 0.0
    %107 = vmatprep.mubr.f32.mxu0 0.0
    %108 = vmatmul.mubr.f32.gmra.mrb[0].mxu0 %v41
    %v109 = vpop.f32.mrb[0].mxu0
    %v110 = vadd.f32 0.0, %v109
    %v111 = vpop.f32.mrb[0].mxu0
    %112 = vdwg.mxu0
    %v114 = vsel %vm28, %v39, 0
    %116 = vmatprep.subr.mxu0 0.0
    %117 = vmatpush1.xpose.msra.mxu0 %v114
    %118 = vmatprep.subr.mxu0 0.0
    %119 = vmatpush1.xpose.msra.mxu0 0.0
    %120 = vmatprep.subr.mxu0 0.0
    %121 = vmatpush1.xpose.msra.mxu0 0.0
    %122 = vmatprep.subr.mxu0 0.0
    %123 = vmatpush1.xpose.msra.mxu0 0.0
    %124 = vmatprep.subr.mxu0 0.0
    %125 = vmatpush1.xpose.msra.mxu0 0.0
    %126 = vmatprep.subr.mxu0 0.0
    %127 = vmatpush1.xpose.msra.mxu0 0.0
    %128 = vmatprep.subr.mxu0 0.0
    %129 = vmatpush1.xpose.msra.mxu0 0.0
    %130 = vmatprep.subr.mxu0 0.0
    %131 = vmatpush1.xpose.msra.mxu0 0.0
    %132 = vmatprep.subr.mxu0 0.0
    %133 = vmatpush1.xpose.msra.mxu0 0.0
    %134 = vmatprep.subr.mxu0 0.0
    %135 = vmatpush1.xpose.msra.mxu0 0.0
    %136 = vmatprep.subr.mxu0 0.0
    %137 = vmatpush1.xpose.msra.mxu0 0.0
    %138 = vmatprep.subr.mxu0 0.0
    %139 = vmatpush1.xpose.msra.mxu0 0.0
    %140 = vmatprep.subr.mxu0 0.0
    %141 = vmatpush1.xpose.msra.mxu0 0.0
    %142 = vmatprep.subr.mxu0 0.0
    %143 = vmatpush1.xpose.msra.mxu0 0.0
    %144 = vmatprep.subr.mxu0 0.0
    %145 = vmatpush1.xpose.msra.mxu0 0.0
    %146 = vmatprep.subr.mxu0 0.0
    %147 = vmatpush1.xpose.msra.mxu0 0.0
    %148 = vmatprep.subr.mxu0 0.0
    %149 = vmatpush1.xpose.msra.mxu0 0.0
    %150 = vmatprep.subr.mxu0 0.0
    %151 = vmatpush1.xpose.msra.mxu0 0.0
    %152 = vmatprep.subr.mxu0 0.0
    %153 = vmatpush1.xpose.msra.mxu0 0.0
    %154 = vmatprep.subr.mxu0 0.0
    %155 = vmatpush1.xpose.msra.mxu0 0.0
    %156 = vmatprep.subr.mxu0 0.0
    %157 = vmatpush1.xpose.msra.mxu0 0.0
    %158 = vmatprep.subr.mxu0 0.0
    %159 = vmatpush1.xpose.msra.mxu0 0.0
    %160 = vmatprep.subr.mxu0 0.0
    %161 = vmatpush1.xpose.msra.mxu0 0.0
    %162 = vmatprep.subr.mxu0 0.0
    %163 = vmatpush1.xpose.msra.mxu0 0.0
    %164 = vmatprep.subr.mxu0 0.0
    %165 = vmatpush1.xpose.msra.mxu0 0.0
    %166 = vmatprep.subr.mxu0 0.0
    %167 = vmatpush1.xpose.msra.mxu0 0.0
    %168 = vmatprep.subr.mxu0 0.0
    %169 = vmatpush1.xpose.msra.mxu0 0.0
    %170 = vmatprep.subr.mxu0 0.0
    %171 = vmatpush1.xpose.msra.mxu0 0.0
    %172 = vmatprep.subr.mxu0 0.0
    %173 = vmatpush1.xpose.msra.mxu0 0.0
    %174 = vmatprep.subr.mxu0 0.0
    %175 = vmatpush1.xpose.msra.mxu0 0.0
    %176 = vmatprep.subr.mxu0 0.0
    %177 = vmatpush1.xpose.msra.mxu0 0.0
    %178 = vmatprep.subr.mxu0 0.0
    %179 = vmatpush1.xpose.msra.mxu0 0.0
    %180 = vmatprep.mubr.f32.mxu0 0.0
    %181 = vmatmul.mubr.f32.gmra.mrb[0].mxu0 %v114
    %v182 = vpop.f32.mrb[0].mxu0
    %v183 = vadd.f32 0.0, %v182
    %v184 = vpop.f32.mrb[0].mxu0
    %185 = vdwg.mxu0
    %v186 = vmul.f32 %v110, 0.06666667
    %v187 = vmul.f32 %v183, 0.06666667
    %vm188 = vcmask 64512
    %189 = vst.msk [vmem:[#allocation5] sm:$0xff] %vm188, %v186
    %190 = vst.msk [vmem:[#allocation5 + $0x8] sm:$0xff] %vm188, %v187
    %vm191 = vcmask 7168
    %192 = vst.msk [vmem:[%s2] sm:$0xff] %vm191, %v36
    %193 = vst.msk [vmem:[%s2 + $0x8] sm:$0xff] %vm191, %v37
    %v194 = vmul.f32 %v38, %v38
    %v195 = vmul.f32 %v39, %v39
    %v196 = vsel %vm28, %v194, 0.0
    %197 = vadd.xlane.f32.xlu0 %v196
    %v198 = vpop.xlane.xlu0 %197
    %v199 = vsel %vm28, %v195, 0.0
    %200 = vadd.xlane.f32.xlu0 %v199
    %v201 = vpop.xlane.xlu0 %200
    %v202 = vmul.f32 %v198, 0.06666667
    %v203 = vmul.f32 %v201, 0.06666667
    %204 = vst.msk [vmem:[%s3] sm:$0xff] %vm191, %v202
    %205 = vst.msk [vmem:[%s3 + $0x8] sm:$0xff] %vm191, %v203
    // Predicated region
    $region10: #{tpu_custom_call.1} parent=1 // pred_check
      _
    $region11: #{tpu_custom_call.1} parent=1 // pred_check_branch
      %207 = sbr.rel (0) target = $region13
    $region12: #{tpu_custom_call.1} parent=1 // pred_region
      %s209 = ssub.s32 256, 256
      %210 = vsyncadd [#allocation4], %s209
      %s211 = sshll.u32 [#allocation5], 4
      %s212 = int_to_ptr.vmem [resolvable:$true] %s211
      %217 = dma.vmem_to_hbm [thread:$0]  %s212, 256, %s1, [#allocation4], 128, 128, 8
    $region13: #{tpu_custom_call.1} parent=1 // pred_fallthru
      _
    // Predicated region
    $region14: #{tpu_custom_call.1} parent=1 // pred_check
      _
    $region15: #{tpu_custom_call.1} parent=1 // pred_check_branch
      %219 = sbr.rel (0) target = $region17
    $region16: #{tpu_custom_call.1} parent=1 // pred_region
      _
    $region17: #{tpu_custom_call.1} parent=1 // pred_fallthru
      _
    // Predicated region
    $region18: #{tpu_custom_call.1} parent=1 // pred_check
      _
    $region19: #{tpu_custom_call.1} parent=1 // pred_check_branch
      %221 = sbr.rel (0) target = $region21
    $region20: #{tpu_custom_call.1} parent=1 // pred_region
      _
    $region21: #{tpu_custom_call.1} parent=1 // pred_fallthru
      _
    // Predicated region
    $region22: #{tpu_custom_call.1} parent=1 // pred_check
      _
    $region23: #{tpu_custom_call.1} parent=1 // pred_check_branch
      %223 = sbr.rel (0) target = $region25
    $region24: #{tpu_custom_call.1} parent=1 // pred_region
      %224 = dma.done [#allocation4], 256
    $region25: #{tpu_custom_call.1} parent=1 // pred_fallthru
      _
    // Predicated region
    $region26: #{tpu_custom_call.1} parent=1 // pred_check
      _
    $region27: #{tpu_custom_call.1} parent=1 // pred_check_branch
      %226 = sbr.rel (0) target = $region29
    $region28: #{tpu_custom_call.1} parent=1 // pred_region
      _
    $region29: #{tpu_custom_call.1} parent=1 // pred_fallthru
      _
    // Predicated region
    $region30: #{tpu_custom_call.1} parent=1 // pred_check
      _
    $region31: #{tpu_custom_call.1} parent=1 // pred_check_branch
      %228 = sbr.rel (0) target = $region33
    $region32: #{tpu_custom_call.1} parent=1 // pred_region
      _
    $region33: #{tpu_custom_call.1} parent=1 // pred_fallthru
      _
    %229 = vsyncpa [#allocation3], 1
    %230 = vsyncpa [#allocation4], 1

</llo_original>
